<compile_context>
chip_gen: v5e
topology: v5e:2x2
jax: 0.10.0
libtpu: 0.0.40
codegen_flags: <defaults>
</compile_context>

<pallas_src>
import jax
import jax.numpy as jnp
from jax.experimental import pallas as pl
from jax.experimental.pallas import tpu as pltpu

NUM_HEAD_COLS = 11   # bowel(1) + extravasation(1) + kidney(3) + liver(3) + spleen(3)
HEAD_PAD = 128       # pad head output columns to one full 128-lane block


# ----------------------------- Pallas kernel --------------------------------

def fused_encoder_heads_kernel(xcol_ref, wconv_ref, bconv_ref, pool_ref,
                               wfused_ref, bfused_ref, o_ref):
    # xcol_ref:   (Bblk*H*W, 9*Cin)  im2col rows for Bblk images
    # wconv_ref:  (9*Cin, F)         folded 3x3 conv weight slab
    # bconv_ref:  (1, F)
    # pool_ref:   (Bblk, Bblk*H*W)   block-diagonal 1/(H*W) mean-pool matrix
    # wfused_ref: (F, HEAD_PAD)      cls_w @ heads_w, zero-padded to 128 cols
    # bfused_ref: (1, HEAD_PAD)      cls_b @ heads_w + heads_b
    # o_ref:      (1, Bblk, HEAD_PAD)

    # 3x3 SAME conv as a single folded-tap matmul, f32 accumulation on MXU.
    act = jnp.dot(xcol_ref[...], wconv_ref[...],
                  preferred_element_type=jnp.float32)              # (Bblk*HW, F)
    act = jnp.maximum(act + bconv_ref[...], 0.0)

    # Per-image global average pool, computed on the MXU.
    pooled = jnp.dot(pool_ref[...], act,
                     preferred_element_type=jnp.float32)           # (Bblk, F)

    # Fused classifier + concatenated heads (single affine layer).
    heads = jnp.dot(pooled.astype(wfused_ref.dtype), wfused_ref[...],
                    preferred_element_type=jnp.float32) + bfused_ref[...]
    o_ref[0] = heads                                               # (Bblk, 128)


# ------------------------------ Host wrapper ---------------------------------

def init_params(key, cin=4, f_enc=32, hidden=32):
    ks = jax.random.split(key, 16)
    scale = 0.1
    return {
        "conv_w": scale * jax.random.normal(ks[0], (3, 3, cin, f_enc), jnp.float32),
        "conv_b": scale * jax.random.normal(ks[1], (f_enc,), jnp.float32),
        # encoder.classifier = nn.Linear(in_features, hidden_size)
        "cls_w": scale * jax.random.normal(ks[2], (f_enc, hidden), jnp.float32),
        "cls_b": scale * jax.random.normal(ks[3], (hidden,), jnp.float32),
        # heads
        "bowel_w": scale * jax.random.normal(ks[4], (hidden, 1), jnp.float32),
        "bowel_b": scale * jax.random.normal(ks[5], (1,), jnp.float32),
        "extr_w": scale * jax.random.normal(ks[6], (hidden, 1), jnp.float32),
        "extr_b": scale * jax.random.normal(ks[7], (1,), jnp.float32),
        "kidney_w": scale * jax.random.normal(ks[8], (hidden, 3), jnp.float32),
        "kidney_b": scale * jax.random.normal(ks[9], (3,), jnp.float32),
        "liver_w": scale * jax.random.normal(ks[10], (hidden, 3), jnp.float32),
        "liver_b": scale * jax.random.normal(ks[11], (3,), jnp.float32),
        "spleen_w": scale * jax.random.normal(ks[12], (hidden, 3), jnp.float32),
        "spleen_b": scale * jax.random.normal(ks[13], (3,), jnp.float32),
    }


def injury_classification_forward(x_nchw, params, *, b_blk=None,
                                  compute_dtype=jnp.float32):
    B, Cin, H, W = x_nchw.shape
    HW = H * W
    f_enc = params["conv_w"].shape[-1]
    hidden = params["cls_w"].shape[-1]

    if b_blk is None:
        # Amortize per-step overhead, but keep >=2 grid steps when B>=2 so a
        # v7x chip (2 TensorCores) isn't left half idle.
        b_blk = max(1, min(8, -(-B // 2)))
    n_blocks = -(-B // b_blk)
    b_pad = n_blocks * b_blk

    # glue: NCHW -> NHWC, 1-pixel zero pad, im2col to (B*HW, 9*Cin).
    x = jnp.transpose(x_nchw, (0, 2, 3, 1)).astype(compute_dtype)
    xp = jnp.pad(x, ((0, 0), (1, 1), (1, 1), (0, 0)))
    cols = [xp[:, dy:dy + H, dx:dx + W, :] for dy in range(3) for dx in range(3)]
    xcol = jnp.concatenate(cols, axis=-1).reshape(B * HW, 9 * Cin)
    if b_pad != B:
        xcol = jnp.pad(xcol, ((0, (b_pad - B) * HW), (0, 0)))

    # Folded conv weight slab + f32 bias.
    w_conv = params["conv_w"].reshape(9 * Cin, f_enc).astype(compute_dtype)
    b_conv = params["conv_b"].reshape(1, f_enc).astype(jnp.float32)

    # Heads concatenated: [bowel(1), extravasation(1), kidney(3), liver(3), spleen(3)],
    # zero-padded to 128 columns, then algebraically fused with the classifier.
    wh = jnp.concatenate([params["bowel_w"], params["extr_w"], params["kidney_w"],
                          params["liver_w"], params["spleen_w"]], axis=1)     # (hidden, 11)
    bh = jnp.concatenate([params["bowel_b"], params["extr_b"], params["kidney_b"],
                          params["liver_b"], params["spleen_b"]], axis=0)     # (11,)
    wh = jnp.pad(wh, ((0, 0), (0, HEAD_PAD - NUM_HEAD_COLS)))                 # (hidden, 128)
    bh = jnp.pad(bh, (0, HEAD_PAD - NUM_HEAD_COLS)).reshape(1, HEAD_PAD)
    w_fused = (params["cls_w"] @ wh).astype(compute_dtype)                    # (F, 128)
    b_fused = (params["cls_b"].reshape(1, hidden) @ wh + bh).astype(jnp.float32)

    # Block-diagonal mean-pool matrix (Bblk, Bblk*HW).
    pool = jnp.kron(jnp.eye(b_blk, dtype=jnp.float32),
                    jnp.full((1, HW), 1.0 / HW, jnp.float32))

    out = pl.pallas_call(
        fused_encoder_heads_kernel,
        out_shape=jax.ShapeDtypeStruct((n_blocks, b_blk, HEAD_PAD), jnp.float32),
        grid=(n_blocks,),
        in_specs=[
            pl.BlockSpec((b_blk * HW, 9 * Cin), lambda b: (b, 0)),
            pl.BlockSpec((9 * Cin, f_enc), lambda b: (0, 0)),
            pl.BlockSpec((1, f_enc), lambda b: (0, 0)),
            pl.BlockSpec((b_blk, b_blk * HW), lambda b: (0, 0)),
            pl.BlockSpec((f_enc, HEAD_PAD), lambda b: (0, 0)),
            pl.BlockSpec((1, HEAD_PAD), lambda b: (0, 0)),
        ],
        out_specs=pl.BlockSpec((1, b_blk, HEAD_PAD), lambda b: (b, 0, 0)),
        compiler_params=pltpu.CompilerParams(
            dimension_semantics=("parallel",)),
    )(xcol, w_conv, b_conv, pool, w_fused, b_fused)

    heads_out = out.reshape(b_pad, HEAD_PAD)[:B, :NUM_HEAD_COLS]
    return {
        "bowel": heads_out[:, 0:1],
        "extravasation": heads_out[:, 1:2],
        "kidney": heads_out[:, 2:5],
        "liver": heads_out[:, 5:8],
        "spleen": heads_out[:, 8:11],
    }


# -------------------------------- reference ----------------------------------

def reference_forward(x_nchw, params):
    x = jnp.transpose(x_nchw, (0, 2, 3, 1)).astype(jnp.float32)
    y = jax.lax.conv_general_dilated(
        x, params["conv_w"], window_strides=(1, 1), padding="SAME",
        dimension_numbers=("NHWC", "HWIO", "NHWC"))
    y = jnp.maximum(y + params["conv_b"], 0.0)
    pooled = jnp.mean(y, axis=(1, 2))
    h = pooled @ params["cls_w"] + params["cls_b"]
    return {
        "bowel": h @ params["bowel_w"] + params["bowel_b"],
        "extravasation": h @ params["extr_w"] + params["extr_b"],
        "kidney": h @ params["kidney_w"] + params["kidney_b"],
        "liver": h @ params["liver_w"] + params["liver_b"],
        "spleen": h @ params["spleen_w"] + params["spleen_b"],
    }


if __name__ == "__main__":
    key = jax.random.PRNGKey(0)
    kx, kp = jax.random.split(key)
    x = jax.random.normal(kx, (2, 4, 16, 16), jnp.float32)   # NCHW, like PyTorch
    params = init_params(kp, cin=4, f_enc=32, hidden=32)

    out = injury_classification_forward(x, params)           # f32 MXU path
    out = jax.tree_util.tree_map(jax.block_until_ready, out)

    ref = reference_forward(x, params)
    for name in ("bowel", "extravasation", "kidney", "liver", "spleen"):
        assert out[name].shape == ref[name].shape, name
        assert jnp.allclose(out[name], ref[name], atol=1e-4, rtol=1e-4), name

    print("KERNEL_OK")
</pallas_src>

<mosaic_0001>
module attributes {stable_mosaic.version = 11 : i64} {
  func.func @fused_encoder_heads_kernel(%arg0: i32, %arg1: memref<256x36xf32, #tpu.memory_space<vmem>>, %arg2: memref<36x32xf32, #tpu.memory_space<vmem>>, %arg3: memref<1x32xf32, #tpu.memory_space<vmem>>, %arg4: memref<1x256xf32, #tpu.memory_space<vmem>>, %arg5: memref<32x128xf32, #tpu.memory_space<vmem>>, %arg6: memref<1x128xf32, #tpu.memory_space<vmem>>, %arg7: memref<1x1x128xf32, #tpu.memory_space<vmem>>) attributes {dimension_semantics = [#tpu.dimension_semantics<parallel>], iteration_bounds = array<i64: 2>, scalar_prefetch = 0 : i64, scratch_operands = 0 : i64, tpu.core_type = #tpu.core_type<tc>, window_params = [{transform_indices = @transform_0, window_bounds = array<i64: 256, 36>}, {pipeline_mode = #tpu.pipeline_mode<synchronous>, transform_indices = @transform_1, window_bounds = array<i64: 36, 32>}, {pipeline_mode = #tpu.pipeline_mode<synchronous>, transform_indices = @transform_2, window_bounds = array<i64: 1, 32>}, {pipeline_mode = #tpu.pipeline_mode<synchronous>, transform_indices = @transform_3, window_bounds = array<i64: 1, 256>}, {pipeline_mode = #tpu.pipeline_mode<synchronous>, transform_indices = @transform_4, window_bounds = array<i64: 32, 128>}, {pipeline_mode = #tpu.pipeline_mode<synchronous>, transform_indices = @transform_5, window_bounds = array<i64: 1, 128>}, {transform_indices = @transform_6, window_bounds = array<i64: 1, 1, 128>}]} {
    %c0 = arith.constant 0 : index
    %c0_0 = arith.constant 0 : index
    %0 = vector.load %arg1[%c0, %c0_0] : memref<256x36xf32, #tpu.memory_space<vmem>>, vector<256x36xf32>
    %c0_1 = arith.constant 0 : index
    %c0_2 = arith.constant 0 : index
    %1 = vector.load %arg2[%c0_1, %c0_2] : memref<36x32xf32, #tpu.memory_space<vmem>>, vector<36x32xf32>
    %cst = arith.constant dense<0.000000e+00> : vector<256x32xf32>
    %2 = tpu.matmul %0, %1, %cst {dimension_numbers = #tpu.dot_dimension_numbers<[1], [0], [0], [1], [0, 0, 1, 1], [], []>} : vector<256x36xf32>, vector<36x32xf32>, vector<256x32xf32> -> vector<256x32xf32>
    %c0_3 = arith.constant 0 : index
    %c0_4 = arith.constant 0 : index
    %3 = vector.load %arg3[%c0_3, %c0_4] : memref<1x32xf32, #tpu.memory_space<vmem>>, vector<1x32xf32>
    %4 = vector.broadcast %3 : vector<1x32xf32> to vector<256x32xf32>
    %5 = arith.addf %2, %4 : vector<256x32xf32>
    %cst_5 = arith.constant 0.000000e+00 : f32
    %6 = vector.broadcast %cst_5 : f32 to vector<256x32xf32>
    %7 = arith.maximumf %5, %6 : vector<256x32xf32>
    %c0_6 = arith.constant 0 : index
    %c0_7 = arith.constant 0 : index
    %8 = vector.load %arg4[%c0_6, %c0_7] : memref<1x256xf32, #tpu.memory_space<vmem>>, vector<1x256xf32>
    %cst_8 = arith.constant dense<0.000000e+00> : vector<1x32xf32>
    %9 = tpu.matmul %8, %7, %cst_8 {dimension_numbers = #tpu.dot_dimension_numbers<[1], [0], [0], [1], [0, 0, 1, 1], [], []>} : vector<1x256xf32>, vector<256x32xf32>, vector<1x32xf32> -> vector<1x32xf32>
    %c0_9 = arith.constant 0 : index
    %c0_10 = arith.constant 0 : index
    %10 = vector.load %arg5[%c0_9, %c0_10] : memref<32x128xf32, #tpu.memory_space<vmem>>, vector<32x128xf32>
    %cst_11 = arith.constant dense<0.000000e+00> : vector<1x128xf32>
    %11 = tpu.matmul %9, %10, %cst_11 {dimension_numbers = #tpu.dot_dimension_numbers<[1], [0], [0], [1], [0, 0, 1, 1], [], []>} : vector<1x32xf32>, vector<32x128xf32>, vector<1x128xf32> -> vector<1x128xf32>
    %c0_12 = arith.constant 0 : index
    %c0_13 = arith.constant 0 : index
    %12 = vector.load %arg6[%c0_12, %c0_13] : memref<1x128xf32, #tpu.memory_space<vmem>>, vector<1x128xf32>
    %13 = arith.addf %11, %12 : vector<1x128xf32>
    %c0_14 = arith.constant 0 : index
    %c0_15 = arith.constant 0 : index
    %c0_16 = arith.constant 0 : index
    %14 = vector.load %arg7[%c0_14, %c0_15, %c0_16] : memref<1x1x128xf32, #tpu.memory_space<vmem>>, vector<1x1x128xf32>
    %15 = vector.shape_cast %14 : vector<1x1x128xf32> to vector<1x128xf32>
    %16 = vector.shape_cast %13 : vector<1x128xf32> to vector<1x1x128xf32>
    tpu.vector_store %arg7[%c0_14, %c0_15, %c0_16], %16 {strides = array<i32>} : memref<1x1x128xf32, #tpu.memory_space<vmem>>, vector<1x1x128xf32>,
    return
  }
  func.func @transform_0(%arg0: i32) -> (i32, i32) {
    %c0_i32 = arith.constant 0 : i32
    %c0_i32_0 = arith.constant 0 : i32
    return %arg0, %c0_i32 : i32, i32
  }
  func.func @transform_1(%arg0: i32) -> (i32, i32) {
    %c0_i32 = arith.constant 0 : i32
    %c0_i32_0 = arith.constant 0 : i32
    %c0_i32_1 = arith.constant 0 : i32
    return %c0_i32, %c0_i32_0 : i32, i32
  }
  func.func @transform_2(%arg0: i32) -> (i32, i32) {
    %c0_i32 = arith.constant 0 : i32
    %c0_i32_0 = arith.constant 0 : i32
    %c0_i32_1 = arith.constant 0 : i32
    return %c0_i32, %c0_i32_0 : i32, i32
  }
  func.func @transform_3(%arg0: i32) -> (i32, i32) {
    %c0_i32 = arith.constant 0 : i32
    %c0_i32_0 = arith.constant 0 : i32
    %c0_i32_1 = arith.constant 0 : i32
    return %c0_i32, %c0_i32_0 : i32, i32
  }
  func.func @transform_4(%arg0: i32) -> (i32, i32) {
    %c0_i32 = arith.constant 0 : i32
    %c0_i32_0 = arith.constant 0 : i32
    %c0_i32_1 = arith.constant 0 : i32
    return %c0_i32, %c0_i32_0 : i32, i32
  }
  func.func @transform_5(%arg0: i32) -> (i32, i32) {
    %c0_i32 = arith.constant 0 : i32
    %c0_i32_0 = arith.constant 0 : i32
    %c0_i32_1 = arith.constant 0 : i32
    return %c0_i32, %c0_i32_0 : i32, i32
  }
  func.func @transform_6(%arg0: i32) -> (i32, i32, i32) {
    %c0_i32 = arith.constant 0 : i32
    %c0_i32_0 = arith.constant 0 : i32
    %c0_i32_1 = arith.constant 0 : i32
    return %arg0, %c0_i32, %c0_i32_0 : i32, i32, i32
  }
}

</mosaic_0001>

<llo_original>
// kernel: tpu_custom_call.1
$region0: #{tpu_custom_call.1}
  #allocation0 [shape = 'u32[]', space=smem, size = 0x4, offset = 0x4, fixed_abs, tag = 'smem constant byte address 0x4 - core index']
  #allocation1 [shape = 'u32[72,128]{1,0:T(1,128)}', space=vmem, size = 0x9000, scoped, tag = 'internal scratch']
  %s0 = inlined_call_operand.vmem [shape: f32[512,36], index: 0, kind: input, shape index: {}]
  %s1 = inlined_call_operand.vmem [shape: f32[36,32], index: 1, kind: input, shape index: {}]
  %s2 = inlined_call_operand.vmem [shape: f32[1,32], index: 2, kind: input, shape index: {}]
  %s3 = inlined_call_operand.vmem [shape: f32[1,256], index: 3, kind: input, shape index: {}]
  %s4 = inlined_call_operand.vmem [shape: f32[32,128], index: 4, kind: input, shape index: {}]
  %s5 = inlined_call_operand.vmem [shape: f32[1,128], index: 5, kind: input, shape index: {}]
  %s6 = inlined_call_operand.hbm [shape: f32[2,1,128], index: 6, kind: output, shape index: {}]
  %s7 = sld [smem:[#allocation0]]
  $region57: #{tpu_custom_call.1} parent=0
    _
  %s9 = ssub.s32 1, %s7
  %s10 = scalar_select 0, %s9, %s7
  $region1: #{tpu_custom_call.1} parent=0
    #allocation2 [shape = 'u8[1024]{0}', space=vmem, size = 0x400, scoped, tag = 'output window, operand 0']
    #allocation3 [shape = 's32[2]{0}', space=sflag, size = 0x8, scoped, tag = 'scoped memory for tpu_custom_call.1']
    %11 = vsyncpa [#allocation3], 0
    %s12 = scalar_lea.sflag [#allocation3], 1
    %13 = vsyncpa %s12, 0
    loop: start=0, step=1, limit=4
    $region2: #{tpu_custom_call.1} parent=1 // loop_pre_header
      _
    $region3: #{tpu_custom_call.1} parent=1 // loop_header
      %s15 = sphi 0, %s19
      %p16 = scmp.ge.s32.totalorder %s15, 4
      %s25 = sphi 0, %s27
      %s28 = sphi 0, %s25
      %s29 = sphi 0, %s28
      %s45 = sphi 0, %s29
      %s49 = sphi 0, %s49
      %s51 = sphi 0, %s49
      %s52 = sphi 0, %s51
      %s66 = sphi 0, %s52
      %s70 = sphi 0, %s70
      %s72 = sphi 0, %s70
      %s73 = sphi 0, %s72
      %s87 = sphi 0, %s73
      %s91 = sphi 0, %s91
      %s93 = sphi 0, %s91
      %s94 = sphi 0, %s93
      %s108 = sphi 0, %s94
      %s112 = sphi 0, %s112
      %s114 = sphi 0, %s112
      %s115 = sphi 0, %s114
      %s129 = sphi 0, %s115
      %s133 = sphi 0, %s133
      %s135 = sphi 0, %s133
      %s136 = sphi 0, %s135
      %s150 = sphi 0, %s136
      %s156 = sphi 0, %s158
      %s159 = sphi 0, %s156
      %s160 = sphi 0, %s159
      %s176 = sphi 0, %s160
    $region4: #{tpu_custom_call.1} parent=1 // loop_header_branch
      %18 = sbr.rel (%p16) target = $region8
    $region5: #{tpu_custom_call.1} parent=1 // loop_body
      %s20 = ssub.s32 %s15, 1
      %s21 = ssub.s32 %s15, 2
      %s22 = sadd.s32 %s15, 1
      %s23 = ssub.s32 %s15, %s22
      %p24 = scmp.eq.s32.totalorder %s23, 0
      %s26 = sadd.s32 %s25, 1
      %s27 = scalar_select %p24, %s25, %s26
      %p30 = pneg %p24
      %p31 = scmp.eq.s32.totalorder %s15, 1
      %p32 = por %p30, %p31
      %p33 = scmp.ne.s32.totalorder %s25, %s28
      %p34 = scmp.eq.s32.totalorder %s15, 0
      %p35 = por %p33, %p34
      %p36 = scmp.ne.s32.totalorder %s25, %s28
      %p37 = scmp.eq.s32.totalorder %s20, 1
      %p38 = por %p36, %p37
      %p39 = scmp.ne.s32.totalorder %s28, %s29
      %p40 = scmp.eq.s32.totalorder %s20, 0
      %p41 = por %p39, %p40
      %p42 = scmp.ne.s32.totalorder %s28, %s29
      %p43 = scmp.eq.s32.totalorder %s21, 1
      %p44 = por %p42, %p43
      %p46 = scmp.ne.s32.totalorder %s29, %s45
      %p47 = scmp.eq.s32.totalorder %s21, 0
      %p48 = por %p46, %p47
      %s50 = sadd.s32 %s49, 1
      %p53 = scmp.eq.s32.totalorder %s15, 1
      %p54 = scmp.ne.s32.totalorder %s49, %s51
      %p55 = scmp.eq.s32.totalorder %s15, 0
      %p56 = por %p54, %p55
      %p57 = scmp.ne.s32.totalorder %s49, %s51
      %p58 = scmp.eq.s32.totalorder %s20, 1
      %p59 = por %p57, %p58
      %p60 = scmp.ne.s32.totalorder %s51, %s52
      %p61 = scmp.eq.s32.totalorder %s20, 0
      %p62 = por %p60, %p61
      %p63 = scmp.ne.s32.totalorder %s51, %s52
      %p64 = scmp.eq.s32.totalorder %s21, 1
      %p65 = por %p63, %p64
      %p67 = scmp.ne.s32.totalorder %s52, %s66
      %p68 = scmp.eq.s32.totalorder %s21, 0
      %p69 = por %p67, %p68
      %s71 = sadd.s32 %s70, 1
      %p74 = scmp.eq.s32.totalorder %s15, 1
      %p75 = scmp.ne.s32.totalorder %s70, %s72
      %p76 = scmp.eq.s32.totalorder %s15, 0
      %p77 = por %p75, %p76
      %p78 = scmp.ne.s32.totalorder %s70, %s72
      %p79 = scmp.eq.s32.totalorder %s20, 1
      %p80 = por %p78, %p79
      %p81 = scmp.ne.s32.totalorder %s72, %s73
      %p82 = scmp.eq.s32.totalorder %s20, 0
      %p83 = por %p81, %p82
      %p84 = scmp.ne.s32.totalorder %s72, %s73
      %p85 = scmp.eq.s32.totalorder %s21, 1
      %p86 = por %p84, %p85
      %p88 = scmp.ne.s32.totalorder %s73, %s87
      %p89 = scmp.eq.s32.totalorder %s21, 0
      %p90 = por %p88, %p89
      %s92 = sadd.s32 %s91, 1
      %p95 = scmp.eq.s32.totalorder %s15, 1
      %p96 = scmp.ne.s32.totalorder %s91, %s93
      %p97 = scmp.eq.s32.totalorder %s15, 0
      %p98 = por %p96, %p97
      %p99 = scmp.ne.s32.totalorder %s91, %s93
      %p100 = scmp.eq.s32.totalorder %s20, 1
      %p101 = por %p99, %p100
      %p102 = scmp.ne.s32.totalorder %s93, %s94
      %p103 = scmp.eq.s32.totalorder %s20, 0
      %p104 = por %p102, %p103
      %p105 = scmp.ne.s32.totalorder %s93, %s94
      %p106 = scmp.eq.s32.totalorder %s21, 1
      %p107 = por %p105, %p106
      %p109 = scmp.ne.s32.totalorder %s94, %s108
      %p110 = scmp.eq.s32.totalorder %s21, 0
      %p111 = por %p109, %p110
      %s113 = sadd.s32 %s112, 1
      %p116 = scmp.eq.s32.totalorder %s15, 1
      %p117 = scmp.ne.s32.totalorder %s112, %s114
      %p118 = scmp.eq.s32.totalorder %s15, 0
      %p119 = por %p117, %p118
      %p120 = scmp.ne.s32.totalorder %s112, %s114
      %p121 = scmp.eq.s32.totalorder %s20, 1
      %p122 = por %p120, %p121
      %p123 = scmp.ne.s32.totalorder %s114, %s115
      %p124 = scmp.eq.s32.totalorder %s20, 0
      %p125 = por %p123, %p124
      %p126 = scmp.ne.s32.totalorder %s114, %s115
      %p127 = scmp.eq.s32.totalorder %s21, 1
      %p128 = por %p126, %p127
      %p130 = scmp.ne.s32.totalorder %s115, %s129
      %p131 = scmp.eq.s32.totalorder %s21, 0
      %p132 = por %p130, %p131
      %s134 = sadd.s32 %s133, 1
      %p137 = scmp.eq.s32.totalorder %s15, 1
      %p138 = scmp.ne.s32.totalorder %s133, %s135
      %p139 = scmp.eq.s32.totalorder %s15, 0
      %p140 = por %p138, %p139
      %p141 = scmp.ne.s32.totalorder %s133, %s135
      %p142 = scmp.eq.s32.totalorder %s20, 1
      %p143 = por %p141, %p142
      %p144 = scmp.ne.s32.totalorder %s135, %s136
      %p145 = scmp.eq.s32.totalorder %s20, 0
      %p146 = por %p144, %p145
      %p147 = scmp.ne.s32.totalorder %s135, %s136
      %p148 = scmp.eq.s32.totalorder %s21, 1
      %p149 = por %p147, %p148
      %p151 = scmp.ne.s32.totalorder %s136, %s150
      %p152 = scmp.eq.s32.totalorder %s21, 0
      %p153 = por %p151, %p152
      %s154 = ssub.s32 %s15, %s22
      %p155 = scmp.eq.s32.totalorder %s154, 0
      %s157 = sadd.s32 %s156, 1
      %s158 = scalar_select %p155, %s156, %s157
      %p161 = pneg %p155
      %p162 = scmp.eq.s32.totalorder %s15, 1
      %p163 = por %p161, %p162
      %p164 = scmp.ne.s32.totalorder %s156, %s159
      %p165 = scmp.eq.s32.totalorder %s15, 0
      %p166 = por %p164, %p165
      %p167 = scmp.ne.s32.totalorder %s156, %s159
      %p168 = scmp.eq.s32.totalorder %s20, 1
      %p169 = por %p167, %p168
      %p170 = scmp.ne.s32.totalorder %s159, %s160
      %p171 = scmp.eq.s32.totalorder %s20, 0
      %p172 = por %p170, %p171
      %p173 = scmp.ne.s32.totalorder %s159, %s160
      %p174 = scmp.eq.s32.totalorder %s21, 1
      %p175 = por %p173, %p174
      %p177 = scmp.ne.s32.totalorder %s160, %s176
      %p178 = scmp.eq.s32.totalorder %s21, 0
      %p179 = por %p177, %p178
      %p180 = scmp.le.s32.totalorder 1, %s15
      %p181 = scmp.lt.s32.totalorder %s15, 3
      %p182 = pnand %p180, %p181
      %p183 = pneg %p182
      // Predicated region
      $region9: #{tpu_custom_call.1} parent=5 // pred_check
        _
      $region10: #{tpu_custom_call.1} parent=5 // pred_check_branch
        %185 = sbr.rel (%p182) target = $region12
      $region11: #{tpu_custom_call.1} parent=5 // pred_region
        %s186 = ssub.s32 %s15, 1
        // Predicated region
        $region13: #{tpu_custom_call.1} parent=11 // pred_check
          %p187 = pneg %p62
        $region14: #{tpu_custom_call.1} parent=11 // pred_check_branch
          %189 = sbr.rel (%p187) target = $region16
        $region15: #{tpu_custom_call.1} parent=11 // pred_region
          _
        $region16: #{tpu_custom_call.1} parent=11 // pred_fallthru
          _
        // Predicated region
        $region17: #{tpu_custom_call.1} parent=11 // pred_check
          %p190 = pneg %p83
        $region18: #{tpu_custom_call.1} parent=11 // pred_check_branch
          %192 = sbr.rel (%p190) target = $region20
        $region19: #{tpu_custom_call.1} parent=11 // pred_region
          _
        $region20: #{tpu_custom_call.1} parent=11 // pred_fallthru
          _
        // Predicated region
        $region21: #{tpu_custom_call.1} parent=11 // pred_check
          %p193 = pneg %p104
        $region22: #{tpu_custom_call.1} parent=11 // pred_check_branch
          %195 = sbr.rel (%p193) target = $region24
        $region23: #{tpu_custom_call.1} parent=11 // pred_region
          _
        $region24: #{tpu_custom_call.1} parent=11 // pred_fallthru
          _
        // Predicated region
        $region25: #{tpu_custom_call.1} parent=11 // pred_check
          %p196 = pneg %p125
        $region26: #{tpu_custom_call.1} parent=11 // pred_check_branch
          %198 = sbr.rel (%p196) target = $region28
        $region27: #{tpu_custom_call.1} parent=11 // pred_region
          _
        $region28: #{tpu_custom_call.1} parent=11 // pred_fallthru
          _
        // Predicated region
        $region29: #{tpu_custom_call.1} parent=11 // pred_check
          %p199 = pneg %p146
        $region30: #{tpu_custom_call.1} parent=11 // pred_check_branch
          %201 = sbr.rel (%p199) target = $region32
        $region31: #{tpu_custom_call.1} parent=11 // pred_region
          _
        $region32: #{tpu_custom_call.1} parent=11 // pred_fallthru
          _
      $region12: #{tpu_custom_call.1} parent=5 // pred_fallthru
        _
      %p202 = scmp.lt.s32.totalorder %s15, 2
      // Predicated region
      $region33: #{tpu_custom_call.1} parent=5 // pred_check
        %p203 = pneg %p202
      $region34: #{tpu_custom_call.1} parent=5 // pred_check_branch
        %205 = sbr.rel (%p203) target = $region36
      $region35: #{tpu_custom_call.1} parent=5 // pred_region
        // Predicated region
        $region37: #{tpu_custom_call.1} parent=35 // pred_check
          %p206 = pneg %p35
        $region38: #{tpu_custom_call.1} parent=35 // pred_check_branch
          %208 = sbr.rel (%p206) target = $region40
        $region39: #{tpu_custom_call.1} parent=35 // pred_region
          %s209 = smul.u32 32, %s15
          %p210 = scmp.lt.s32.totalorder %s209, 63
          %s211 = scalar_select %p210, %s209, 63
          %s212 = smul.addr %s211, 8
          %s213 = scalar_lea.vmem %s0, %s212
          %s214 = smul.u32 32, %s15
        $region40: #{tpu_custom_call.1} parent=35 // pred_fallthru
          _
      $region36: #{tpu_custom_call.1} parent=5 // pred_fallthru
        _
      %p215 = scmp.le.s32.totalorder 1, %s15
      %p216 = scmp.lt.s32.totalorder %s15, 3
      %p217 = pnand %p215, %p216
      %p218 = pneg %p217
      // Predicated region
      $region41: #{tpu_custom_call.1} parent=5 // pred_check
        _
      $region42: #{tpu_custom_call.1} parent=5 // pred_check_branch
        %220 = sbr.rel (%p217) target = $region44
      $region43: #{tpu_custom_call.1} parent=5 // pred_region
        %s221 = ssub.s32 %s15, 1
        %s222 = smul.u32 32, %s20
        %p223 = scmp.lt.s32.totalorder %s222, 63
        %s224 = scalar_select %p223, %s222, 63
        %s225 = smul.addr %s224, 8
        %s226 = scalar_lea.vmem %s0, %s225
        %p227 = pneg %p41
        %p228 = pneg %p38
        %p229 = pneg %p62
        %p230 = pneg %p59
        %p231 = pneg %p83
        %p232 = pneg %p80
        %p233 = pneg %p104
        %p234 = pneg %p101
        %p235 = pneg %p125
        %p236 = pneg %p122
        %p237 = pneg %p146
        %p238 = pneg %p143
        %p239 = pneg %p172
        %p240 = pneg %p169
        %s241 = sand.u32 %s159, 1
        %s242 = scalar_lea.sflag [#allocation3], %s241
        %s243 = sand.u32 %s159, 1
        %s244 = scalar_lea.vmem [#allocation2], %s243
        %s245 = smul.u32 32, %s20
        %p246 = scmp.lt.s32.totalorder %s245, 63
        %s247 = scalar_select %p246, %s245, 63
        %s248 = smul.addr %s247, 8
        %s249 = scalar_lea.vmem %s0, %s248
        %s250 = smul.u32 32, %s20
        %v251 = vld [vmem:[%s249] sm:$0xff]
        %v252 = vld [vmem:[%s249 + $0x8] sm:$0xff]
        %v253 = vld [vmem:[%s249 + $0x10] sm:$0xff]
        %v254 = vld [vmem:[%s249 + $0x18] sm:$0xff]
        %v255 = vld [vmem:[%s249 + $0x20] sm:$0xff]
        %v256 = vld [vmem:[%s249 + $0x28] sm:$0xff]
        %v257 = vld [vmem:[%s249 + $0x30] sm:$0xff]
        %v258 = vld [vmem:[%s249 + $0x38] sm:$0xff]
        %v259 = vld [vmem:[%s249 + $0x40] sm:$0xff]
        %v260 = vld [vmem:[%s249 + $0x48] sm:$0xff]
        %v261 = vld [vmem:[%s249 + $0x50] sm:$0xff]
        %v262 = vld [vmem:[%s249 + $0x58] sm:$0xff]
        %v263 = vld [vmem:[%s249 + $0x60] sm:$0xff]
        %v264 = vld [vmem:[%s249 + $0x68] sm:$0xff]
        %v265 = vld [vmem:[%s249 + $0x70] sm:$0xff]
        %v266 = vld [vmem:[%s249 + $0x78] sm:$0xff]
        %v267 = vld [vmem:[%s249 + $0x80] sm:$0xff]
        %v268 = vld [vmem:[%s249 + $0x88] sm:$0xff]
        %v269 = vld [vmem:[%s249 + $0x90] sm:$0xff]
        %v270 = vld [vmem:[%s249 + $0x98] sm:$0xff]
        %v271 = vld [vmem:[%s249 + $0xa0] sm:$0xff]
        %v272 = vld [vmem:[%s249 + $0xa8] sm:$0xff]
        %v273 = vld [vmem:[%s249 + $0xb0] sm:$0xff]
        %v274 = vld [vmem:[%s249 + $0xb8] sm:$0xff]
        %v275 = vld [vmem:[%s249 + $0xc0] sm:$0xff]
        %v276 = vld [vmem:[%s249 + $0xc8] sm:$0xff]
        %v277 = vld [vmem:[%s249 + $0xd0] sm:$0xff]
        %v278 = vld [vmem:[%s249 + $0xd8] sm:$0xff]
        %v279 = vld [vmem:[%s249 + $0xe0] sm:$0xff]
        %v280 = vld [vmem:[%s249 + $0xe8] sm:$0xff]
        %v281 = vld [vmem:[%s249 + $0xf0] sm:$0xff]
        %v282 = vld [vmem:[%s249 + $0xf8] sm:$0xff]
        %v283 = vld [vmem:[%s1] sm:$0xff]
        %v284 = vld [vmem:[%s1 + $0x8] sm:$0xff]
        %v285 = vld [vmem:[%s1 + $0x10] sm:$0xff]
        %v286 = vld [vmem:[%s1 + $0x18] sm:$0xff]
        %v287 = vld [vmem:[%s1 + $0x20] sm:$0xf]
        %v288 = vld [vmem:[%s2] sm:$0x1]
        %v290 = vperm.slane %v288, 0
        %vm292 = vcmask 293888
        %v294 = vsel %vm292, %v251, 0
        %v297 = vsel %vm292, %v252, 0
        %v300 = vsel %vm292, %v253, 0
        %v303 = vsel %vm292, %v254, 0
        %v306 = vsel %vm292, %v255, 0
        %v309 = vsel %vm292, %v256, 0
        %v312 = vsel %vm292, %v257, 0
        %v315 = vsel %vm292, %v258, 0
        %v318 = vsel %vm292, %v259, 0
        %v321 = vsel %vm292, %v260, 0
        %v324 = vsel %vm292, %v261, 0
        %v327 = vsel %vm292, %v262, 0
        %v330 = vsel %vm292, %v263, 0
        %v333 = vsel %vm292, %v264, 0
        %v336 = vsel %vm292, %v265, 0
        %v339 = vsel %vm292, %v266, 0
        %v342 = vsel %vm292, %v267, 0
        %v345 = vsel %vm292, %v268, 0
        %v348 = vsel %vm292, %v269, 0
        %v351 = vsel %vm292, %v270, 0
        %v354 = vsel %vm292, %v271, 0
        %v357 = vsel %vm292, %v272, 0
        %v360 = vsel %vm292, %v273, 0
        %v363 = vsel %vm292, %v274, 0
        %v366 = vsel %vm292, %v275, 0
        %v369 = vsel %vm292, %v276, 0
        %v372 = vsel %vm292, %v277, 0
        %v375 = vsel %vm292, %v278, 0
        %v378 = vsel %vm292, %v279, 0
        %v381 = vsel %vm292, %v280, 0
        %v384 = vsel %vm292, %v281, 0
        %v387 = vsel %vm292, %v282, 0
        %vm389 = vcmask 1043456
        %v391 = vsel %vm389, %v287, 0
        %393 = vmatpush.msra.mxu0 0.0
        %394 = vmatpush.msra.mxu0 0.0
        %395 = vmatpush.msra.mxu0 0.0
        %396 = vmatpush.msra.mxu0 0.0
        %397 = vmatpush.msra.mxu0 0.0
        %398 = vmatpush.msra.mxu0 0.0
        %399 = vmatpush.msra.mxu0 0.0
        %400 = vmatpush.msra.mxu0 0.0
        %401 = vmatpush.msra.mxu0 0.0
        %402 = vmatpush.msra.mxu0 0.0
        %403 = vmatpush.msra.mxu0 0.0
        %404 = vmatpush.msra.mxu0 %v391
        %405 = vmatpush.msra.mxu0 %v286
        %406 = vmatpush.msra.mxu0 %v285
        %407 = vmatpush.msra.mxu0 %v284
        %408 = vmatpush.msra.mxu0 %v283
        %409 = vmatmul.f32.gmra.mxu0 %v294
        %v410 = vpop.f32.mrf.mxu0
        %v411 = vadd.f32 %v290, %v410
        %412 = vmatmul.f32.gmra.mxu0 %v297
        %v413 = vpop.f32.mrf.mxu0
        %v414 = vadd.f32 %v290, %v413
        %415 = vmatmul.f32.gmra.mxu0 %v300
        %v416 = vpop.f32.mrf.mxu0
        %v417 = vadd.f32 %v290, %v416
        %418 = vmatmul.f32.gmra.mxu0 %v303
        %v419 = vpop.f32.mrf.mxu0
        %v420 = vadd.f32 %v290, %v419
        %421 = vmatmul.f32.gmra.mxu0 %v306
        %v422 = vpop.f32.mrf.mxu0
        %v423 = vadd.f32 %v290, %v422
        %424 = vmatmul.f32.gmra.mxu0 %v309
        %v425 = vpop.f32.mrf.mxu0
        %v426 = vadd.f32 %v290, %v425
        %427 = vmatmul.f32.gmra.mxu0 %v312
        %v428 = vpop.f32.mrf.mxu0
        %v429 = vadd.f32 %v290, %v428
        %430 = vmatmul.f32.gmra.mxu0 %v315
        %v431 = vpop.f32.mrf.mxu0
        %v432 = vadd.f32 %v290, %v431
        %433 = vmatmul.f32.gmra.mxu0 %v318
        %v434 = vpop.f32.mrf.mxu0
        %v435 = vadd.f32 %v290, %v434
        %436 = vmatmul.f32.gmra.mxu0 %v321
        %v437 = vpop.f32.mrf.mxu0
        %v438 = vadd.f32 %v290, %v437
        %439 = vmatmul.f32.gmra.mxu0 %v324
        %v440 = vpop.f32.mrf.mxu0
        %v441 = vadd.f32 %v290, %v440
        %442 = vmatmul.f32.gmra.mxu0 %v327
        %v443 = vpop.f32.mrf.mxu0
        %v444 = vadd.f32 %v290, %v443
        %445 = vmatmul.f32.gmra.mxu0 %v330
        %v446 = vpop.f32.mrf.mxu0
        %v447 = vadd.f32 %v290, %v446
        %448 = vmatmul.f32.gmra.mxu0 %v333
        %v449 = vpop.f32.mrf.mxu0
        %v450 = vadd.f32 %v290, %v449
        %451 = vmatmul.f32.gmra.mxu0 %v336
        %v452 = vpop.f32.mrf.mxu0
        %v453 = vadd.f32 %v290, %v452
        %454 = vmatmul.f32.gmra.mxu0 %v339
        %v455 = vpop.f32.mrf.mxu0
        %v456 = vadd.f32 %v290, %v455
        %457 = vmatmul.f32.gmra.mxu0 %v342
        %v458 = vpop.f32.mrf.mxu0
        %v459 = vadd.f32 %v290, %v458
        %460 = vmatmul.f32.gmra.mxu0 %v345
        %v461 = vpop.f32.mrf.mxu0
        %v462 = vadd.f32 %v290, %v461
        %463 = vmatmul.f32.gmra.mxu0 %v348
        %v464 = vpop.f32.mrf.mxu0
        %v465 = vadd.f32 %v290, %v464
        %466 = vmatmul.f32.gmra.mxu0 %v351
        %v467 = vpop.f32.mrf.mxu0
        %v468 = vadd.f32 %v290, %v467
        %469 = vmatmul.f32.gmra.mxu0 %v354
        %v470 = vpop.f32.mrf.mxu0
        %v471 = vadd.f32 %v290, %v470
        %472 = vmatmul.f32.gmra.mxu0 %v357
        %v473 = vpop.f32.mrf.mxu0
        %v474 = vadd.f32 %v290, %v473
        %475 = vmatmul.f32.gmra.mxu0 %v360
        %v476 = vpop.f32.mrf.mxu0
        %v477 = vadd.f32 %v290, %v476
        %478 = vmatmul.f32.gmra.mxu0 %v363
        %v479 = vpop.f32.mrf.mxu0
        %v480 = vadd.f32 %v290, %v479
        %481 = vmatmul.f32.gmra.mxu0 %v366
        %v482 = vpop.f32.mrf.mxu0
        %v483 = vadd.f32 %v290, %v482
        %484 = vmatmul.f32.gmra.mxu0 %v369
        %v485 = vpop.f32.mrf.mxu0
        %v486 = vadd.f32 %v290, %v485
        %487 = vmatmul.f32.gmra.mxu0 %v372
        %v488 = vpop.f32.mrf.mxu0
        %v489 = vadd.f32 %v290, %v488
        %490 = vmatmul.f32.gmra.mxu0 %v375
        %v491 = vpop.f32.mrf.mxu0
        %v492 = vadd.f32 %v290, %v491
        %493 = vmatmul.f32.gmra.mxu0 %v378
        %v494 = vpop.f32.mrf.mxu0
        %v495 = vadd.f32 %v290, %v494
        %496 = vmatmul.f32.gmra.mxu0 %v381
        %v497 = vpop.f32.mrf.mxu0
        %v498 = vadd.f32 %v290, %v497
        %499 = vmatmul.f32.gmra.mxu0 %v384
        %v500 = vpop.f32.mrf.mxu0
        %v501 = vadd.f32 %v290, %v500
        %502 = vmatmul.f32.gmra.mxu0 %v387
        %v503 = vpop.f32.mrf.mxu0
        %v504 = vadd.f32 %v290, %v503
        %505 = vdwg.mxu0
        %v506 = vmax.f32 %v411, 0.0
        %v507 = vmax.f32 %v414, 0.0
        %v508 = vmax.f32 %v417, 0.0
        %v509 = vmax.f32 %v420, 0.0
        %v510 = vmax.f32 %v423, 0.0
        %v511 = vmax.f32 %v426, 0.0
        %v512 = vmax.f32 %v429, 0.0
        %v513 = vmax.f32 %v432, 0.0
        %v514 = vmax.f32 %v435, 0.0
        %v515 = vmax.f32 %v438, 0.0
        %v516 = vmax.f32 %v441, 0.0
        %v517 = vmax.f32 %v444, 0.0
        %v518 = vmax.f32 %v447, 0.0
        %v519 = vmax.f32 %v450, 0.0
        %v520 = vmax.f32 %v453, 0.0
        %v521 = vmax.f32 %v456, 0.0
        %v522 = vmax.f32 %v459, 0.0
        %v523 = vmax.f32 %v462, 0.0
        %v524 = vmax.f32 %v465, 0.0
        %v525 = vmax.f32 %v468, 0.0
        %v526 = vmax.f32 %v471, 0.0
        %v527 = vmax.f32 %v474, 0.0
        %v528 = vmax.f32 %v477, 0.0
        %v529 = vmax.f32 %v480, 0.0
        %v530 = vmax.f32 %v483, 0.0
        %v531 = vmax.f32 %v486, 0.0
        %v532 = vmax.f32 %v489, 0.0
        %v533 = vmax.f32 %v492, 0.0
        %v534 = vmax.f32 %v495, 0.0
        %v535 = vmax.f32 %v498, 0.0
        %v536 = vmax.f32 %v501, 0.0
        %v537 = vmax.f32 %v504, 0.0
        %v538 = vld [vmem:[%s3] sm:$0x3]
        %v540 = vperm.slane %v538, 0
        %v541 = vperm.slane %v538, 1
        %544 = vmatpush.msra.mxu0 %v521
        %545 = vmatpush.msra.mxu0 %v520
        %546 = vmatpush.msra.mxu0 %v519
        %547 = vmatpush.msra.mxu0 %v518
        %548 = vmatpush.msra.mxu0 %v517
        %549 = vmatpush.msra.mxu0 %v516
        %550 = vmatpush.msra.mxu0 %v515
        %551 = vmatpush.msra.mxu0 %v514
        %552 = vmatpush.msra.mxu0 %v513
        %553 = vmatpush.msra.mxu0 %v512
        %554 = vmatpush.msra.mxu0 %v511
        %555 = vmatpush.msra.mxu0 %v510
        %556 = vmatpush.msra.mxu0 %v509
        %557 = vmatpush.msra.mxu0 %v508
        %558 = vmatpush.msra.mxu0 %v507
        %559 = vmatpush.msra.mxu0 %v506
        %560 = vmatmul.f32.gmra.mxu0 %v540
        %v561 = vpop.f32.mrf.mxu0
        %v562 = vadd.f32 0.0, %v561
        %563 = vdwg.mxu0
        %564 = vmatpush.msra.mxu0 %v537
        %565 = vmatpush.msra.mxu0 %v536
        %566 = vmatpush.msra.mxu0 %v535
        %567 = vmatpush.msra.mxu0 %v534
        %568 = vmatpush.msra.mxu0 %v533
        %569 = vmatpush.msra.mxu0 %v532
        %570 = vmatpush.msra.mxu0 %v531
        %571 = vmatpush.msra.mxu0 %v530
        %572 = vmatpush.msra.mxu0 %v529
        %573 = vmatpush.msra.mxu0 %v528
        %574 = vmatpush.msra.mxu0 %v527
        %575 = vmatpush.msra.mxu0 %v526
        %576 = vmatpush.msra.mxu0 %v525
        %577 = vmatpush.msra.mxu0 %v524
        %578 = vmatpush.msra.mxu0 %v523
        %579 = vmatpush.msra.mxu0 %v522
        %580 = vmatmul.f32.gmra.mxu0 %v541
        %v581 = vpop.f32.mrf.mxu0
        %v582 = vadd.f32 %v562, %v581
        %583 = vdwg.mxu0
        %v584 = vld [vmem:[%s4] sm:$0xff]
        %v585 = vld [vmem:[%s4 + $0x8] sm:$0xff]
        %v586 = vld [vmem:[%s4 + $0x10] sm:$0xff]
        %v587 = vld [vmem:[%s4 + $0x18] sm:$0xff]
        %v588 = vld [vmem:[%s5] sm:$0x1]
        %vm589 = vcmask 261120
        %v591 = vsel %vm589, %v582, 0
        %593 = vmatpush.msra.mxu0 0.0
        %594 = vmatpush.msra.mxu0 0.0
        %595 = vmatpush.msra.mxu0 0.0
        %596 = vmatpush.msra.mxu0 0.0
        %597 = vmatpush.msra.mxu0 0.0
        %598 = vmatpush.msra.mxu0 0.0
        %599 = vmatpush.msra.mxu0 0.0
        %600 = vmatpush.msra.mxu0 0.0
        %601 = vmatpush.msra.mxu0 0.0
        %602 = vmatpush.msra.mxu0 0.0
        %603 = vmatpush.msra.mxu0 0.0
        %604 = vmatpush.msra.mxu0 0.0
        %605 = vmatpush.msra.mxu0 %v587
        %606 = vmatpush.msra.mxu0 %v586
        %607 = vmatpush.msra.mxu0 %v585
        %608 = vmatpush.msra.mxu0 %v584
        %609 = vmatmul.f32.gmra.mxu0 %v591
        %v610 = vpop.f32.mrf.mxu0
        %v611 = vadd.f32 %v588, %v610
        %612 = vdwg.mxu0
        %613 = vst [vmem:[%s244] sm:$0x1] %v611
        %s614 = sand.u32 %s159, 1
        %s615 = scalar_lea.sflag [#allocation3], %s614
        %s616 = sand.u32 %s159, 1
        %s617 = scalar_lea.vmem [#allocation2], %s616
        // Predicated region
        $region45: #{tpu_custom_call.1} parent=43 // pred_check
          %p618 = pneg %p169
        $region46: #{tpu_custom_call.1} parent=43 // pred_check_branch
          %620 = sbr.rel (%p618) target = $region48
        $region47: #{tpu_custom_call.1} parent=43 // pred_region
          %622 = vsyncadd %s615, 0
          %s623 = scalar_lea.hbm %s6, %s20
          %s625 = sshll.u32 %s617, 4
          %s626 = int_to_ptr.vmem [resolvable:$true] %s625
          %s627 = sshll.u32 %s623, 4
          %s628 = int_to_ptr.hbm [resolvable:$true] %s627
          %630 = dma.vmem_to_hbm [thread:$0]  %s626, 16, %s628, %s615
        $region48: #{tpu_custom_call.1} parent=43 // pred_fallthru
          _
      $region44: #{tpu_custom_call.1} parent=5 // pred_fallthru
        _
      %p631 = scmp.le.s32.totalorder 2, %s15
      // Predicated region
      $region49: #{tpu_custom_call.1} parent=5 // pred_check
        %p632 = pneg %p631
      $region50: #{tpu_custom_call.1} parent=5 // pred_check_branch
        %634 = sbr.rel (%p632) target = $region52
      $region51: #{tpu_custom_call.1} parent=5 // pred_region
        %s635 = ssub.s32 %s15, 2
        // Predicated region
        $region53: #{tpu_custom_call.1} parent=51 // pred_check
          %p636 = pneg %p175
        $region54: #{tpu_custom_call.1} parent=51 // pred_check_branch
          %638 = sbr.rel (%p636) target = $region56
        $region55: #{tpu_custom_call.1} parent=51 // pred_region
          %s639 = sand.u32 %s160, 1
          %s640 = scalar_lea.sflag [#allocation3], %s639
          %s641 = sand.u32 %s160, 1
          %s642 = scalar_lea.vmem [#allocation2], %s641
          %644 = dma.done %s640, 16
        $region56: #{tpu_custom_call.1} parent=51 // pred_fallthru
          _
      $region52: #{tpu_custom_call.1} parent=5 // pred_fallthru
        _
    $region6: #{tpu_custom_call.1} parent=1 // loop_footer
      %s19 = sadd.s32 1, %s15
    $region7: #{tpu_custom_call.1} parent=1 // loop_footer_branch
      %14 = sbr.rel target = $region3
    $region8: #{tpu_custom_call.1} parent=1 // loop_exit
      _
    %645 = vsyncpa [#allocation3], 1
    %s646 = scalar_lea.sflag [#allocation3], 1
    %647 = vsyncpa %s646, 1

</llo_original>
